<compile_context>
chip_gen: v5e
topology: v5e:2x2
jax: 0.10.0
libtpu: 0.0.40
codegen_flags: <defaults>
</compile_context>

<pallas_src>
import functools
import math

import jax
import jax.numpy as jnp
from jax import lax
from jax.experimental import pallas as pl
from jax.experimental.pallas import tpu as pltpu


# ----------------------------------------------------------------------------
# Tiling / spec helpers
# ----------------------------------------------------------------------------

def _pick_tile(n, candidates=(512, 256, 128, 64, 32, 16, 8)):
    """Largest candidate that evenly divides n, else n itself (full block)."""
    for c in candidates:
        if c <= n and n % c == 0:
            return c
    return n


def _pick_query_tile(T, softmax_budget_bytes=8 << 20):
    """Query-tile size: prefer >=2 grid steps (both v7x TensorCores busy) and
    bound the ~3x f32 [TQ, T] softmax working set (scores/e/attn)."""
    tq = T
    for c in (512, 256, 128, 64, 32, 16, 8):
        if c < T and T % c == 0:
            tq = c
            break
    while tq > 8 and 3 * tq * T * 4 > softmax_budget_bytes and T % (tq // 2) == 0:
        tq //= 2
    return tq


def _vmem_limit_bytes():
    """~75% of physical VMEM: ~96 MiB on v5e/v6e, ~48 MiB on v7x."""
    try:
        cap = pltpu.get_tpu_info().vmem_capacity_bytes
    except Exception:
        cap = 64 * 1024 * 1024  # conservative (v7x) fallback
    return int(cap) * 3 // 4


def _resident_spec(shape):
    """Full-array block with a constant block index -> stays resident in VMEM.
    Single-buffered (constant blocks don't need double buffering)."""
    nd = len(shape)
    idx = lambda i, _nd=nd: (0,) * _nd   # default-arg capture (no late binding)
    try:
        return pl.BlockSpec(shape, idx, pipeline_mode=pl.Buffered(1))
    except Exception:
        return pl.BlockSpec(shape, idx)


# ----------------------------------------------------------------------------
# Kernels
# ----------------------------------------------------------------------------

def kv_projection_kernel(x_ref, wk_ref, bk_ref, wv_ref, bv_ref, k_ref, v_ref):
    """K = x @ Wk + bk, V = x @ Wv + bv, computed ONCE for the full sequence."""
    x = x_ref[...].astype(wk_ref.dtype)
    k = jnp.dot(x, wk_ref[...], preferred_element_type=jnp.float32) + bk_ref[...]
    v = jnp.dot(x, wv_ref[...], preferred_element_type=jnp.float32) + bv_ref[...]
    k_ref[...] = k.astype(k_ref.dtype)
    v_ref[...] = v.astype(v_ref.dtype)


def attn_ffn_kernel(x_ref, k_ref, v_ref,
                    wq_ref, bq_ref,
                    wo_ref, bo_ref,
                    w1_ref, b1_ref,
                    w2_ref, b2_ref,
                    out_ref, attn_ref,
                    *, ffn_chunk, n_ffn_chunks):
    cdt = wq_ref.dtype                 # compute (operand) dtype: f32 or bf16
    x = x_ref[...]                     # [TQ, D] f32 query tile

    # Q projection (1/sqrt(Di) already folded into wq/bq on the host).
    q = jnp.dot(x.astype(cdt), wq_ref[...],
                preferred_element_type=jnp.float32) + bq_ref[...]

    # scores = q @ k^T, contracting the feature axis (no explicit transpose).
    scores = lax.dot_general(q.astype(cdt), k_ref[...],
                             (((1,), (1,)), ((), ())),
                             preferred_element_type=jnp.float32)   # [TQ, T]

    # Softmax over the key axis (exact: each query tile sees every key).
    m = jnp.max(scores, axis=-1, keepdims=True)
    e = jnp.exp(scores - m)
    attn = e * pl.reciprocal(jnp.sum(e, axis=-1, keepdims=True), approx=False)

    o1 = jnp.dot(attn.astype(cdt), v_ref[...],
                 preferred_element_type=jnp.float32)               # [TQ, Di]

    # Reshape back to d_model + residual 1.
    r1 = (jnp.dot(o1.astype(cdt), wo_ref[...],
                  preferred_element_type=jnp.float32)
          + bo_ref[...] + x)
    r1c = r1.astype(cdt)

    # Feed-forward: Linear(D, 4D) -> ReLU -> Linear(4D, D), chunked over 4D so
    # the [TQ, 4D] activation never has to be fully resident.
    if n_ffn_chunks == 1:
        h = jnp.maximum(
            jnp.dot(r1c, w1_ref[...], preferred_element_type=jnp.float32)
            + b1_ref[...], 0.0)
        o2 = jnp.dot(h.astype(cdt), w2_ref[...],
                     preferred_element_type=jnp.float32)
    else:
        def body(c, acc):
            off = pl.multiple_of(c * ffn_chunk, ffn_chunk)
            hc = (jnp.dot(r1c, w1_ref[:, pl.ds(off, ffn_chunk)],
                          preferred_element_type=jnp.float32)
                  + b1_ref[:, pl.ds(off, ffn_chunk)])
            hc = jnp.maximum(hc, 0.0)
            return acc + jnp.dot(hc.astype(cdt),
                                 w2_ref[pl.ds(off, ffn_chunk), :],
                                 preferred_element_type=jnp.float32)
        # Short static trip count -> unroll for LLO scheduling visibility.
        o2 = lax.fori_loop(0, n_ffn_chunks, body,
                           jnp.zeros(x.shape, jnp.float32), unroll=True)
    o2 = o2 + b2_ref[...]

    # Residual 2.
    out_ref[...] = (o2 + r1).astype(out_ref.dtype)
    attn_ref[...] = attn.astype(attn_ref.dtype)


# ----------------------------------------------------------------------------
# Wrappers
# ----------------------------------------------------------------------------

def _kv_projection(x, wk, bk, wv, bv, *, kv_dtype, vmem_limit):
    T, D = x.shape
    Di = wk.shape[1]
    TR = _pick_tile(T)
    n_r = T // TR
    return pl.pallas_call(
        kv_projection_kernel,
        out_shape=(jax.ShapeDtypeStruct((T, Di), kv_dtype),
                   jax.ShapeDtypeStruct((T, Di), kv_dtype)),
        grid=(n_r,),
        in_specs=[pl.BlockSpec((TR, D), lambda i: (i, 0)),
                  _resident_spec(wk.shape), _resident_spec(bk.shape),
                  _resident_spec(wv.shape), _resident_spec(bv.shape)],
        out_specs=(pl.BlockSpec((TR, Di), lambda i: (i, 0)),
                   pl.BlockSpec((TR, Di), lambda i: (i, 0))),
        compiler_params=pltpu.CompilerParams(
            dimension_semantics=("parallel",),
            vmem_limit_bytes=vmem_limit),
    )(x, wk, bk, wv, bv)


def transformer_layer(x, params, d_internal, *,
                      compute_dtype=jnp.float32,
                      attn_dtype=jnp.float32):
    """x: [T, d_model] float32. params: dict of weights ([in, out] layout).
    compute_dtype=jnp.bfloat16 gives the MXU-native production path (f32
    accumulation and f32 softmax are kept either way)."""
    T, D = x.shape
    Di = d_internal
    H = 4 * D
    vmem_limit = _vmem_limit_bytes()

    # Host-side weight prep (once): fold attention scale into Q projection,
    # cast weight matrices to the matmul operand dtype (biases stay f32).
    scale = 1.0 / math.sqrt(Di)
    wq = (params["wq"] * scale).astype(compute_dtype)
    bq = params["bq"] * scale
    wk = params["wk"].astype(compute_dtype)
    wv = params["wv"].astype(compute_dtype)
    wo = params["wo"].astype(compute_dtype)
    w1 = params["w1"].astype(compute_dtype)
    w2 = params["w2"].astype(compute_dtype)
    bk, bv = params["bk"], params["bv"]
    bo, b1, b2 = params["bo"], params["b1"], params["b2"]

    # K/V computed ONCE (not per query tile).
    k, v = _kv_projection(x, wk, bk, wv, bv,
                          kv_dtype=compute_dtype, vmem_limit=vmem_limit)

    TQ = _pick_query_tile(T)
    n_q = T // TQ
    ffn_chunk = _pick_tile(H, candidates=(512, 256, 128))
    n_ffn_chunks = H // ffn_chunk

    kernel = functools.partial(attn_ffn_kernel,
                               ffn_chunk=ffn_chunk,
                               n_ffn_chunks=n_ffn_chunks)

    in_specs = [
        pl.BlockSpec((TQ, D), lambda i: (i, 0)),   # x query tile (streamed)
        _resident_spec(k.shape), _resident_spec(v.shape),
        _resident_spec(wq.shape), _resident_spec(bq.shape),
        _resident_spec(wo.shape), _resident_spec(bo.shape),
        _resident_spec(w1.shape), _resident_spec(b1.shape),
        _resident_spec(w2.shape), _resident_spec(b2.shape),
    ]
    out_specs = (pl.BlockSpec((TQ, D), lambda i: (i, 0)),
                 pl.BlockSpec((TQ, T), lambda i: (i, 0)))

    out, attn = pl.pallas_call(
        kernel,
        out_shape=(jax.ShapeDtypeStruct((T, D), jnp.float32),
                   jax.ShapeDtypeStruct((T, T), attn_dtype)),
        grid=(n_q,),
        in_specs=in_specs,
        out_specs=out_specs,
        compiler_params=pltpu.CompilerParams(
            dimension_semantics=("parallel",),      # shard query tiles across TCs
            vmem_limit_bytes=vmem_limit),
    )(x, k, v, wq, bq, wo, bo, w1, b1, w2, b2)
    return out, attn


# ----------------------------------------------------------------------------
# Reference + init (for the self-contained correctness check)
# ----------------------------------------------------------------------------

def init_params(key, d_model, d_internal):
    """Mimics torch.nn.Linear default init (uniform +/- 1/sqrt(fan_in)).
    Weights stored as [in, out]; biases as [1, out]."""
    def linear(k, fan_in, fan_out):
        kw, kb = jax.random.split(k)
        bound = 1.0 / math.sqrt(fan_in)
        w = jax.random.uniform(kw, (fan_in, fan_out), jnp.float32, -bound, bound)
        b = jax.random.uniform(kb, (1, fan_out), jnp.float32, -bound, bound)
        return w, b

    keys = jax.random.split(key, 6)
    wq, bq = linear(keys[0], d_model, d_internal)
    wk, bk = linear(keys[1], d_model, d_internal)
    wv, bv = linear(keys[2], d_model, d_internal)
    wo, bo = linear(keys[3], d_internal, d_model)
    w1, b1 = linear(keys[4], d_model, 4 * d_model)
    w2, b2 = linear(keys[5], 4 * d_model, d_model)
    return dict(wq=wq, bq=bq, wk=wk, bk=bk, wv=wv, bv=bv,
                wo=wo, bo=bo, w1=w1, b1=b1, w2=w2, b2=b2)


def reference_forward(x, p, d_internal):
    """Pure-JAX reference replicating the PyTorch forward semantics."""
    q = x @ p["wq"] + p["bq"]
    k = x @ p["wk"] + p["bk"]
    v = x @ p["wv"] + p["bv"]
    scores = (q @ k.T) / math.sqrt(d_internal)
    attn = jax.nn.softmax(scores, axis=1)
    o1 = attn @ v
    r1 = o1 @ p["wo"] + p["bo"] + x
    h = jnp.maximum(r1 @ p["w1"] + p["b1"], 0.0)
    o2 = h @ p["w2"] + p["b2"]
    return o2 + r1, attn


if __name__ == "__main__":
    T = 16          # sequence length (2 query tiles -> exercises the grid)
    d_model = 32
    d_internal = 16

    key = jax.random.PRNGKey(0)
    k_x, k_p = jax.random.split(key)
    x = jax.random.normal(k_x, (T, d_model), jnp.float32)
    params = init_params(k_p, d_model, d_internal)

    ref_out, ref_attn = reference_forward(x, params, d_internal)

    # f32-operand path: matches the PyTorch reference to tight tolerances.
    out, attn = transformer_layer(x, params, d_internal)
    out = jax.block_until_ready(out)
    attn = jax.block_until_ready(attn)
    assert jnp.allclose(out, ref_out, atol=1e-4, rtol=1e-4), "output mismatch (f32)"
    assert jnp.allclose(attn, ref_attn, atol=1e-5, rtol=1e-5), "attention mismatch (f32)"

    # bf16-operand production path (MXU-native); f32 accumulation kept, so
    # only loose tolerances are expected to hold.
    out_bf, attn_bf = transformer_layer(x, params, d_internal,
                                        compute_dtype=jnp.bfloat16)
    out_bf = jax.block_until_ready(out_bf)
    attn_bf = jax.block_until_ready(attn_bf)
    assert jnp.allclose(out_bf, ref_out, atol=1e-1, rtol=1e-1), "output mismatch (bf16)"
    assert jnp.allclose(attn_bf, ref_attn, atol=5e-2), "attention mismatch (bf16)"

    print("KERNEL_OK")
</pallas_src>

<mosaic_0001>
module attributes {stable_mosaic.version = 11 : i64} {
  func.func @kv_projection_kernel(%arg0: i32, %arg1: memref<16x32xf32, #tpu.memory_space<vmem>>, %arg2: memref<32x16xf32, #tpu.memory_space<vmem>>, %arg3: memref<1x16xf32, #tpu.memory_space<vmem>>, %arg4: memref<32x16xf32, #tpu.memory_space<vmem>>, %arg5: memref<1x16xf32, #tpu.memory_space<vmem>>, %arg6: memref<16x16xf32, #tpu.memory_space<vmem>>, %arg7: memref<16x16xf32, #tpu.memory_space<vmem>>) attributes {dimension_semantics = [#tpu.dimension_semantics<parallel>], iteration_bounds = array<i64: 1>, scalar_prefetch = 0 : i64, scratch_operands = 0 : i64, tpu.core_type = #tpu.core_type<tc>, window_params = [{transform_indices = @transform_0, window_bounds = array<i64: 16, 32>}, {pipeline_mode = #tpu.pipeline_mode<synchronous>, transform_indices = @transform_1, window_bounds = array<i64: 32, 16>}, {pipeline_mode = #tpu.pipeline_mode<synchronous>, transform_indices = @transform_2, window_bounds = array<i64: 1, 16>}, {pipeline_mode = #tpu.pipeline_mode<synchronous>, transform_indices = @transform_3, window_bounds = array<i64: 32, 16>}, {pipeline_mode = #tpu.pipeline_mode<synchronous>, transform_indices = @transform_4, window_bounds = array<i64: 1, 16>}, {transform_indices = @transform_5, window_bounds = array<i64: 16, 16>}, {transform_indices = @transform_6, window_bounds = array<i64: 16, 16>}]} {
    %c0 = arith.constant 0 : index
    %c0_0 = arith.constant 0 : index
    %0 = vector.load %arg1[%c0, %c0_0] : memref<16x32xf32, #tpu.memory_space<vmem>>, vector<16x32xf32>
    %c0_1 = arith.constant 0 : index
    %c0_2 = arith.constant 0 : index
    %1 = vector.load %arg2[%c0_1, %c0_2] : memref<32x16xf32, #tpu.memory_space<vmem>>, vector<32x16xf32>
    %cst = arith.constant dense<0.000000e+00> : vector<16x16xf32>
    %2 = tpu.matmul %0, %1, %cst {dimension_numbers = #tpu.dot_dimension_numbers<[1], [0], [0], [1], [0, 0, 1, 1], [], []>} : vector<16x32xf32>, vector<32x16xf32>, vector<16x16xf32> -> vector<16x16xf32>
    %c0_3 = arith.constant 0 : index
    %c0_4 = arith.constant 0 : index
    %3 = vector.load %arg3[%c0_3, %c0_4] : memref<1x16xf32, #tpu.memory_space<vmem>>, vector<1x16xf32>
    %4 = vector.broadcast %3 : vector<1x16xf32> to vector<16x16xf32>
    %5 = arith.addf %2, %4 : vector<16x16xf32>
    %c0_5 = arith.constant 0 : index
    %c0_6 = arith.constant 0 : index
    %6 = vector.load %arg4[%c0_5, %c0_6] : memref<32x16xf32, #tpu.memory_space<vmem>>, vector<32x16xf32>
    %cst_7 = arith.constant dense<0.000000e+00> : vector<16x16xf32>
    %7 = tpu.matmul %0, %6, %cst_7 {dimension_numbers = #tpu.dot_dimension_numbers<[1], [0], [0], [1], [0, 0, 1, 1], [], []>} : vector<16x32xf32>, vector<32x16xf32>, vector<16x16xf32> -> vector<16x16xf32>
    %c0_8 = arith.constant 0 : index
    %c0_9 = arith.constant 0 : index
    %8 = vector.load %arg5[%c0_8, %c0_9] : memref<1x16xf32, #tpu.memory_space<vmem>>, vector<1x16xf32>
    %9 = vector.broadcast %8 : vector<1x16xf32> to vector<16x16xf32>
    %10 = arith.addf %7, %9 : vector<16x16xf32>
    %c0_10 = arith.constant 0 : index
    %c0_11 = arith.constant 0 : index
    %11 = vector.load %arg6[%c0_10, %c0_11] : memref<16x16xf32, #tpu.memory_space<vmem>>, vector<16x16xf32>
    tpu.vector_store %arg6[%c0_10, %c0_11], %5 {strides = array<i32>} : memref<16x16xf32, #tpu.memory_space<vmem>>, vector<16x16xf32>,
    %c0_12 = arith.constant 0 : index
    %c0_13 = arith.constant 0 : index
    %12 = vector.load %arg7[%c0_12, %c0_13] : memref<16x16xf32, #tpu.memory_space<vmem>>, vector<16x16xf32>
    tpu.vector_store %arg7[%c0_12, %c0_13], %10 {strides = array<i32>} : memref<16x16xf32, #tpu.memory_space<vmem>>, vector<16x16xf32>,
    return
  }
  func.func @transform_0(%arg0: i32) -> (i32, i32) {
    %c0_i32 = arith.constant 0 : i32
    %c0_i32_0 = arith.constant 0 : i32
    return %arg0, %c0_i32 : i32, i32
  }
  func.func @transform_1(%arg0: i32) -> (i32, i32) {
    %c0_i32 = arith.constant 0 : i32
    %c0_i32_0 = arith.constant 0 : i32
    %c0_i32_1 = arith.constant 0 : i32
    return %c0_i32, %c0_i32_0 : i32, i32
  }
  func.func @transform_2(%arg0: i32) -> (i32, i32) {
    %c0_i32 = arith.constant 0 : i32
    %c0_i32_0 = arith.constant 0 : i32
    %c0_i32_1 = arith.constant 0 : i32
    return %c0_i32, %c0_i32_0 : i32, i32
  }
  func.func @transform_3(%arg0: i32) -> (i32, i32) {
    %c0_i32 = arith.constant 0 : i32
    %c0_i32_0 = arith.constant 0 : i32
    %c0_i32_1 = arith.constant 0 : i32
    return %c0_i32, %c0_i32_0 : i32, i32
  }
  func.func @transform_4(%arg0: i32) -> (i32, i32) {
    %c0_i32 = arith.constant 0 : i32
    %c0_i32_0 = arith.constant 0 : i32
    %c0_i32_1 = arith.constant 0 : i32
    return %c0_i32, %c0_i32_0 : i32, i32
  }
  func.func @transform_5(%arg0: i32) -> (i32, i32) {
    %c0_i32 = arith.constant 0 : i32
    %c0_i32_0 = arith.constant 0 : i32
    return %arg0, %c0_i32 : i32, i32
  }
  func.func @transform_6(%arg0: i32) -> (i32, i32) {
    %c0_i32 = arith.constant 0 : i32
    %c0_i32_0 = arith.constant 0 : i32
    return %arg0, %c0_i32 : i32, i32
  }
}

</mosaic_0001>

<llo_original>
// kernel: tpu_custom_call.1
$region0: #{tpu_custom_call.1}
  #allocation0 [shape = 'u32[]', space=smem, size = 0x4, offset = 0x4, fixed_abs, tag = 'smem constant byte address 0x4 - core index']
  #allocation1 [shape = 'u32[72,128]{1,0:T(1,128)}', space=vmem, size = 0x9000, scoped, tag = 'internal scratch']
  %s0 = inlined_call_operand.vmem [shape: f32[16,32], index: 0, kind: input, shape index: {}]
  %s1 = inlined_call_operand.vmem [shape: f32[32,16], index: 1, kind: input, shape index: {}]
  %s2 = inlined_call_operand.vmem [shape: f32[1,16], index: 2, kind: input, shape index: {}]
  %s3 = inlined_call_operand.vmem [shape: f32[32,16], index: 3, kind: input, shape index: {}]
  %s4 = inlined_call_operand.vmem [shape: f32[1,16], index: 4, kind: input, shape index: {}]
  %s5 = inlined_call_operand.hbm [shape: f32[16,16], index: 5, kind: output, shape index: {0}]
  %s6 = inlined_call_operand.hbm [shape: f32[16,16], index: 6, kind: output, shape index: {1}]
  %7 = xla_tuple %s5, %s6
  %s8 = sld [smem:[#allocation0]]
  $region38: #{tpu_custom_call.1} parent=0
    _
  %s10 = ssub.s32 1, %s8
  %s11 = scalar_select 0, %s10, %s8
  $region1: #{tpu_custom_call.1} parent=0
    #allocation2 [shape = 'u8[8192]{0}', space=vmem, size = 0x2000, scoped, tag = 'output window, operand 0, single buffered']
    #allocation3 [shape = 's32[1]{0}', space=sflag, size = 0x4, scoped, tag = 'scoped memory for tpu_custom_call.1']
    #allocation4 [shape = 'u8[8192]{0}', space=vmem, size = 0x2000, scoped, tag = 'output window, operand 1, single buffered']
    #allocation5 [shape = 's32[1]{0}', space=sflag, size = 0x4, scoped, tag = 'scoped memory for tpu_custom_call.1']
    %12 = vsyncpa [#allocation3], 0
    %13 = vsyncpa [#allocation5], 0
    // Predicated region
    $region2: #{tpu_custom_call.1} parent=1 // pred_check
      _
    $region3: #{tpu_custom_call.1} parent=1 // pred_check_branch
      %15 = sbr.rel (0) target = $region5
    $region4: #{tpu_custom_call.1} parent=1 // pred_region
      _
    $region5: #{tpu_custom_call.1} parent=1 // pred_fallthru
      _
    // Predicated region
    $region6: #{tpu_custom_call.1} parent=1 // pred_check
      _
    $region7: #{tpu_custom_call.1} parent=1 // pred_check_branch
      %17 = sbr.rel (0) target = $region9
    $region8: #{tpu_custom_call.1} parent=1 // pred_region
      _
    $region9: #{tpu_custom_call.1} parent=1 // pred_fallthru
      _
    // Predicated region
    $region10: #{tpu_custom_call.1} parent=1 // pred_check
      _
    $region11: #{tpu_custom_call.1} parent=1 // pred_check_branch
      %19 = sbr.rel (0) target = $region13
    $region12: #{tpu_custom_call.1} parent=1 // pred_region
      _
    $region13: #{tpu_custom_call.1} parent=1 // pred_fallthru
      _
    // Predicated region
    $region14: #{tpu_custom_call.1} parent=1 // pred_check
      _
    $region15: #{tpu_custom_call.1} parent=1 // pred_check_branch
      %21 = sbr.rel (0) target = $region17
    $region16: #{tpu_custom_call.1} parent=1 // pred_region
      _
    $region17: #{tpu_custom_call.1} parent=1 // pred_fallthru
      _
    // Predicated region
    $region18: #{tpu_custom_call.1} parent=1 // pred_check
      _
    $region19: #{tpu_custom_call.1} parent=1 // pred_check_branch
      %23 = sbr.rel (0) target = $region21
    $region20: #{tpu_custom_call.1} parent=1 // pred_region
      _
    $region21: #{tpu_custom_call.1} parent=1 // pred_fallthru
      _
    %v24 = vld [vmem:[%s0] sm:$0xff]
    %v25 = vld [vmem:[%s0 + $0x8] sm:$0xff]
    %v26 = vld [vmem:[%s1] sm:$0xff]
    %v27 = vld [vmem:[%s1 + $0x8] sm:$0xff]
    %v28 = vld [vmem:[%s1 + $0x10] sm:$0xff]
    %v29 = vld [vmem:[%s1 + $0x18] sm:$0xff]
    %v30 = vld [vmem:[%s2] sm:$0x1]
    %v32 = vperm.slane %v30, 0
    %vm34 = vcmask 261120
    %v36 = vsel %vm34, %v24, 0
    %v39 = vsel %vm34, %v25, 0
    %41 = vmatpush.msra.mxu0 0.0
    %42 = vmatpush.msra.mxu0 0.0
    %43 = vmatpush.msra.mxu0 0.0
    %44 = vmatpush.msra.mxu0 0.0
    %45 = vmatpush.msra.mxu0 0.0
    %46 = vmatpush.msra.mxu0 0.0
    %47 = vmatpush.msra.mxu0 0.0
    %48 = vmatpush.msra.mxu0 0.0
    %49 = vmatpush.msra.mxu0 0.0
    %50 = vmatpush.msra.mxu0 0.0
    %51 = vmatpush.msra.mxu0 0.0
    %52 = vmatpush.msra.mxu0 0.0
    %53 = vmatpush.msra.mxu0 %v29
    %54 = vmatpush.msra.mxu0 %v28
    %55 = vmatpush.msra.mxu0 %v27
    %56 = vmatpush.msra.mxu0 %v26
    %57 = vmatmul.f32.gmra.mxu0 %v36
    %v58 = vpop.f32.mrf.mxu0
    %v59 = vadd.f32 %v32, %v58
    %60 = vmatmul.f32.gmra.mxu0 %v39
    %v61 = vpop.f32.mrf.mxu0
    %v62 = vadd.f32 %v32, %v61
    %63 = vdwg.mxu0
    %v64 = vld [vmem:[%s3] sm:$0xff]
    %v65 = vld [vmem:[%s3 + $0x8] sm:$0xff]
    %v66 = vld [vmem:[%s3 + $0x10] sm:$0xff]
    %v67 = vld [vmem:[%s3 + $0x18] sm:$0xff]
    %v68 = vld [vmem:[%s4] sm:$0x1]
    %v70 = vperm.slane %v68, 0
    %72 = vmatpush.msra.mxu0 0.0
    %73 = vmatpush.msra.mxu0 0.0
    %74 = vmatpush.msra.mxu0 0.0
    %75 = vmatpush.msra.mxu0 0.0
    %76 = vmatpush.msra.mxu0 0.0
    %77 = vmatpush.msra.mxu0 0.0
    %78 = vmatpush.msra.mxu0 0.0
    %79 = vmatpush.msra.mxu0 0.0
    %80 = vmatpush.msra.mxu0 0.0
    %81 = vmatpush.msra.mxu0 0.0
    %82 = vmatpush.msra.mxu0 0.0
    %83 = vmatpush.msra.mxu0 0.0
    %84 = vmatpush.msra.mxu0 %v67
    %85 = vmatpush.msra.mxu0 %v66
    %86 = vmatpush.msra.mxu0 %v65
    %87 = vmatpush.msra.mxu0 %v64
    %88 = vmatmul.f32.gmra.mxu0 %v36
    %v89 = vpop.f32.mrf.mxu0
    %v90 = vadd.f32 %v70, %v89
    %91 = vmatmul.f32.gmra.mxu0 %v39
    %v92 = vpop.f32.mrf.mxu0
    %v93 = vadd.f32 %v70, %v92
    %94 = vdwg.mxu0
    %vm95 = vcmask 130048
    %96 = vst.msk [vmem:[#allocation2] sm:$0xff] %vm95, %v59
    %97 = vst.msk [vmem:[#allocation2 + $0x8] sm:$0xff] %vm95, %v62
    %98 = vst.msk [vmem:[#allocation4] sm:$0xff] %vm95, %v90
    %99 = vst.msk [vmem:[#allocation4 + $0x8] sm:$0xff] %vm95, %v93
    // Predicated region
    $region22: #{tpu_custom_call.1} parent=1 // pred_check
      _
    $region23: #{tpu_custom_call.1} parent=1 // pred_check_branch
      %101 = sbr.rel (0) target = $region25
    $region24: #{tpu_custom_call.1} parent=1 // pred_region
      %103 = vsyncadd [#allocation3], 0
      %s104 = sshll.u32 [#allocation2], 4
      %s105 = int_to_ptr.vmem [resolvable:$true] %s104
      %s106 = sshll.u32 %s5, 4
      %s107 = int_to_ptr.hbm [resolvable:$true] %s106
      %112 = dma.vmem_to_hbm [thread:$0]  %s105, 256, %s107, [#allocation3], 128, 128, 8
    $region25: #{tpu_custom_call.1} parent=1 // pred_fallthru
      _
    // Predicated region
    $region26: #{tpu_custom_call.1} parent=1 // pred_check
      _
    $region27: #{tpu_custom_call.1} parent=1 // pred_check_branch
      %114 = sbr.rel (0) target = $region29
    $region28: #{tpu_custom_call.1} parent=1 // pred_region
      %116 = vsyncadd [#allocation5], 0
      %s117 = sshll.u32 [#allocation4], 4
      %s118 = int_to_ptr.vmem [resolvable:$true] %s117
      %s119 = sshll.u32 %s6, 4
      %s120 = int_to_ptr.hbm [resolvable:$true] %s119
      %125 = dma.vmem_to_hbm [thread:$0]  %s118, 256, %s120, [#allocation5], 128, 128, 8
    $region29: #{tpu_custom_call.1} parent=1 // pred_fallthru
      _
    // Predicated region
    $region30: #{tpu_custom_call.1} parent=1 // pred_check
      _
    $region31: #{tpu_custom_call.1} parent=1 // pred_check_branch
      %127 = sbr.rel (0) target = $region33
    $region32: #{tpu_custom_call.1} parent=1 // pred_region
      %129 = dma.done [#allocation3], 256
    $region33: #{tpu_custom_call.1} parent=1 // pred_fallthru
      _
    // Predicated region
    $region34: #{tpu_custom_call.1} parent=1 // pred_check
      _
    $region35: #{tpu_custom_call.1} parent=1 // pred_check_branch
      %131 = sbr.rel (0) target = $region37
    $region36: #{tpu_custom_call.1} parent=1 // pred_region
      %133 = dma.done [#allocation5], 256
    $region37: #{tpu_custom_call.1} parent=1 // pred_fallthru
      _
    %134 = vsyncpa [#allocation3], 1
    %135 = vsyncpa [#allocation5], 1

</llo_original>
